<compile_context>
chip_gen: v6e
topology: v6e:2x2x1
jax: 0.10.0
libtpu: 0.0.40
codegen_flags: <defaults>
</compile_context>

<pallas_src>
import functools

import jax
import jax.numpy as jnp
from jax import lax
from jax.experimental import pallas as pl
from jax.experimental.pallas import tpu as pltpu


def _round_up(x, m):
    return (x + m - 1) // m * m


def _nonneg_linear_kernel(x_ref, w_ref, b_ref, o_ref, *scratch,
                          compute_dtype, relu_in_kernel, multi_k):
    if relu_in_kernel:
        # W tile in PyTorch (N, K) layout, stored dtype (f32).  ReLU in the
        # stored dtype first (v5e has no bf16 VPU), then cast for the MXU and
        # contract both operands on their last (K) dim.
        w = jnp.maximum(w_ref[...], 0).astype(compute_dtype)
        part = lax.dot_general(
            x_ref[...], w,
            dimension_numbers=(((1,), (1,)), ((), ())),
            preferred_element_type=jnp.float32,
        )
    else:
        # W was ReLU'd, cast and transposed to (K, N) once in the wrapper:
        # plain (M,K)x(K,N) MXU dot, no in-kernel transpose possible.
        part = jnp.dot(x_ref[...], w_ref[...],
                       preferred_element_type=jnp.float32)

    if not multi_k:
        # K collapsed to a single step: no accumulator, no branches.
        o_ref[...] = (part + b_ref[...]).astype(o_ref.dtype)
        return

    # Tiled K: accumulate in f32.  For f32 outputs the resident output block
    # itself is the accumulator (saves tm*tn*4 B of always-live VMEM).
    acc_ref = scratch[0] if scratch else o_ref
    k = pl.program_id(2)

    @pl.when(k == 0)
    def _init():
        acc_ref[...] = jnp.zeros_like(acc_ref)

    acc_ref[...] += part

    @pl.when(k == pl.num_programs(2) - 1)
    def _finalize():
        # Bias added once (not per K-step), then cast to the output dtype.
        o_ref[...] = (acc_ref[...] + b_ref[...]).astype(o_ref.dtype)


def nonneg_linear(x, weight, bias=None, *, compute_dtype=None,
                  tm=512, tn=512, tk=None):
    """y = x @ relu(weight).T + bias  (NonNegLinear forward).

    x: (..., K); weight: (N, K) (PyTorch layout); bias: (N,) or None.
    """
    *lead, K = x.shape
    N, K2 = weight.shape
    assert K == K2, (K, K2)
    out_dtype = x.dtype
    if compute_dtype is None:
        # bf16 MXU path (f32 accumulation) by default for f32 inputs.
        compute_dtype = jnp.bfloat16 if x.dtype == jnp.float32 else x.dtype
    compute_dtype = jnp.dtype(compute_dtype)
    if bias is None:
        bias = jnp.zeros((N,), jnp.float32)

    x2 = x.reshape(-1, K)
    B = x2.shape[0]

    # ---- tile sizes --------------------------------------------------------
    c_item = compute_dtype.itemsize
    sub_m = max(8, 32 // c_item)                  # sublane packing of stored x
    tm_e = min(_round_up(tm, sub_m), _round_up(B, sub_m))   # no B over-padding
    n_r = _round_up(N, 128)                       # lane-dense output columns
    tn_e = min(_round_up(tn, 128), n_r)
    k_r = _round_up(K, 128)
    if tk is None:
        # Collapse the K grid axis entirely when an x-tile row stays <= 8 KiB
        # (K <= 4096 bf16 / 2048 f32); otherwise tile K coarsely.
        tk_e = k_r if k_r * c_item <= 8192 else min(2048, k_r)
    else:
        tk_e = min(_round_up(tk, 128), k_r)

    B_p = _round_up(B, tm_e)
    N_p = _round_up(N, tn_e)
    K_p = _round_up(K, tk_e)
    grid_i, grid_j, grid_k = B_p // tm_e, N_p // tn_e, K_p // tk_e

    # v7x megacore: ensure >=2 parallel blocks when N allows it (never adds
    # padding: tn_e stays a divisor-compatible multiple of 128 of n_r).
    if grid_i == 1 and grid_j == 1 and tn_e >= 256:
        half = tn_e // 2
        tn_e = half if half % 128 == 0 else 128
        N_p = _round_up(N, tn_e)
        grid_j = N_p // tn_e

    multi_k = grid_k > 1
    relu_in_kernel = grid_i == 1          # wrapper preprocessing is a wash here
    use_scratch = multi_k and jnp.dtype(out_dtype) != jnp.dtype(jnp.float32)

    # ---- operand preparation (zero padding is inert: relu(0) == 0 and padded
    # output rows/cols are sliced off) ---------------------------------------
    x_p = x2.astype(compute_dtype)
    if (B_p, K_p) != (B, K):
        x_p = jnp.pad(x_p, ((0, B_p - B), (0, K_p - K)))

    if relu_in_kernel:
        w_p = weight                               # (N, K), stored dtype
        if (N_p, K_p) != (N, K):
            w_p = jnp.pad(w_p, ((0, N_p - N), (0, K_p - K)))
        w_spec = pl.BlockSpec((tn_e, tk_e), lambda i, j, k: (j, k))
    else:
        # ReLU + cast + transpose once; W then streams as (K, N) compute dtype.
        w_p = jnp.maximum(weight, 0).astype(compute_dtype).T   # (K, N)
        if (K_p, N_p) != (K, N):
            w_p = jnp.pad(w_p, ((0, K_p - K), (0, N_p - N)))
        w_spec = pl.BlockSpec((tk_e, tn_e), lambda i, j, k: (k, j))

    b_p = bias.astype(jnp.float32)
    if N_p != N:
        b_p = jnp.pad(b_p, (0, N_p - N))
    b_p = b_p.reshape(1, N_p)

    # ---- VMEM budget / compiler params --------------------------------------
    x_tile = tm_e * tk_e * c_item
    w_tile = tn_e * tk_e * w_p.dtype.itemsize
    b_tile = tn_e * 4
    o_tile = tm_e * tn_e * jnp.dtype(out_dtype).itemsize
    acc_tile = tm_e * tn_e * 4 if use_scratch else 0
    vmem_needed = 2 * (x_tile + w_tile + b_tile + o_tile) + acc_tile
    vmem_limit = int(min(64 << 20, max(32 << 20, int(vmem_needed * 1.5))))

    # x is re-read once per j-block, W (and bias) once per i-block.
    bytes_accessed = (grid_j * x_p.size * x_p.dtype.itemsize
                      + grid_i * w_p.size * w_p.dtype.itemsize
                      + grid_i * b_p.size * b_p.dtype.itemsize
                      + B_p * N_p * jnp.dtype(out_dtype).itemsize)

    kernel = functools.partial(
        _nonneg_linear_kernel,
        compute_dtype=compute_dtype,
        relu_in_kernel=relu_in_kernel,
        multi_k=multi_k,
    )

    scratch_shapes = ([pltpu.VMEM((tm_e, tn_e), jnp.float32)]
                      if use_scratch else [])

    out = pl.pallas_call(
        kernel,
        out_shape=jax.ShapeDtypeStruct((B_p, N_p), out_dtype),
        grid_spec=pltpu.PrefetchScalarGridSpec(
            num_scalar_prefetch=0,
            grid=(grid_i, grid_j, grid_k),
            in_specs=[
                pl.BlockSpec((tm_e, tk_e), lambda i, j, k: (i, k)),   # x
                w_spec,                                               # W
                pl.BlockSpec((1, tn_e), lambda i, j, k: (0, j)),      # bias
            ],
            out_specs=pl.BlockSpec((tm_e, tn_e), lambda i, j, k: (i, j)),
            scratch_shapes=scratch_shapes,
        ),
        compiler_params=pltpu.CompilerParams(
            dimension_semantics=("parallel", "parallel", "arbitrary"),
            vmem_limit_bytes=vmem_limit,
        ),
        cost_estimate=pl.CostEstimate(
            flops=2 * B_p * N_p * K_p,
            transcendentals=0,
            bytes_accessed=bytes_accessed,
        ),
    )(x_p, w_p, b_p)

    if (B_p, N_p) != (B, N):
        out = out[:B, :N]
    return out.reshape(*lead, N)


def init_nonneg_linear_params(key, in_features, out_features, dtype=jnp.float32):
    """Deterministic init matching the PyTorch module's __init__."""
    kw, _ = jax.random.split(key)
    # torch.nn.init.normal_(weight, mean=1.0, std=0.1)
    weight = 1.0 + 0.1 * jax.random.normal(kw, (out_features, in_features), dtype)
    # torch.nn.init.constant_(bias, 0.0)
    bias = jnp.zeros((out_features,), dtype)
    # normalization_multiplier = ones((1,)) — a parameter, not used in forward.
    norm_mult = jnp.ones((1,), dtype)
    return weight, bias, norm_mult


if __name__ == "__main__":
    key = jax.random.PRNGKey(0)
    k_x, k_p, k_x2 = jax.random.split(key, 3)

    # Small PIP-Net-like head: 8 pooled prototype vectors -> 16 classes.
    batch, in_features, out_features = 8, 32, 16
    x = jax.random.normal(k_x, (batch, in_features), jnp.float32)
    weight, bias, _norm = init_nonneg_linear_params(k_p, in_features, out_features)
    y_ref = x @ jnp.maximum(weight, 0.0).T + bias

    # Exact f32 MXU path (single i-block -> in-kernel ReLU, collapsed K).
    y_f32 = jax.block_until_ready(
        nonneg_linear(x, weight, bias, compute_dtype=jnp.float32))
    assert y_f32.shape == (batch, out_features)
    assert jnp.allclose(y_f32, y_ref, atol=1e-5, rtol=1e-5)

    # Default fast path: bf16 MXU compute with f32 accumulation.
    y = jax.block_until_ready(nonneg_linear(x, weight, bias))
    assert y.shape == (batch, out_features)
    assert jnp.allclose(y, y_ref, atol=1e-1, rtol=5e-2)

    # Exercise the multi-block / tiled-K paths (wrapper-preprocessed (K,N) W,
    # accumulate-into-output for f32, f32 scratch for bf16 output) with small
    # tiles so the test shapes stay tiny.
    B2, K2, N2 = 64, 384, 256
    x2 = jax.random.normal(k_x2, (B2, K2), jnp.float32)
    w2, b2, _ = init_nonneg_linear_params(k_p, K2, N2)
    y2_ref = x2 @ jnp.maximum(w2, 0.0).T + b2

    y2 = jax.block_until_ready(nonneg_linear(x2, w2, b2, tm=32, tn=128, tk=128))
    assert y2.shape == (B2, N2)
    assert jnp.allclose(y2, y2_ref, atol=5e-1, rtol=5e-2)

    y2_bf16 = jax.block_until_ready(
        nonneg_linear(x2.astype(jnp.bfloat16), w2, b2, tm=32, tn=128, tk=128))
    assert y2_bf16.dtype == jnp.bfloat16
    assert jnp.allclose(y2_bf16.astype(jnp.float32), y2_ref, atol=2.0, rtol=5e-2)

    print("KERNEL_OK")
</pallas_src>

<mosaic_0001>
module attributes {stable_mosaic.version = 11 : i64} {
  func.func @_nonneg_linear_kernel(%arg0: i32, %arg1: i32, %arg2: i32, %arg3: memref<8x128xf32, #tpu.memory_space<vmem>>, %arg4: memref<128x128xf32, #tpu.memory_space<vmem>>, %arg5: memref<1x128xf32, #tpu.memory_space<vmem>>, %arg6: memref<8x128xf32, #tpu.memory_space<vmem>>) attributes {dimension_semantics = [#tpu.dimension_semantics<parallel>, #tpu.dimension_semantics<parallel>, #tpu.dimension_semantics<arbitrary>], iteration_bounds = array<i64: 1, 1, 1>, scalar_prefetch = 0 : i64, scratch_operands = 0 : i64, tpu.core_type = #tpu.core_type<tc>, window_params = [{transform_indices = @transform_0, window_bounds = array<i64: 8, 128>}, {transform_indices = @transform_1, window_bounds = array<i64: 128, 128>}, {transform_indices = @transform_2, window_bounds = array<i64: 1, 128>}, {transform_indices = @transform_3, window_bounds = array<i64: 8, 128>}]} {
    %c0 = arith.constant 0 : index
    %c0_0 = arith.constant 0 : index
    %0 = vector.load %arg4[%c0, %c0_0] : memref<128x128xf32, #tpu.memory_space<vmem>>, vector<128x128xf32>
    %cst = arith.constant 0.000000e+00 : f32
    %1 = vector.broadcast %cst : f32 to vector<128x128xf32>
    %2 = arith.maximumf %0, %1 : vector<128x128xf32>
    %c0_1 = arith.constant 0 : index
    %c0_2 = arith.constant 0 : index
    %3 = vector.load %arg3[%c0_1, %c0_2] : memref<8x128xf32, #tpu.memory_space<vmem>>, vector<8x128xf32>
    %cst_3 = arith.constant dense<0.000000e+00> : vector<8x128xf32>
    %4 = tpu.matmul %3, %2, %cst_3 {dimension_numbers = #tpu.dot_dimension_numbers<[1], [1], [0], [0], [0, 0, 1, 0], [], []>} : vector<8x128xf32>, vector<128x128xf32>, vector<8x128xf32> -> vector<8x128xf32>
    %c0_4 = arith.constant 0 : index
    %c0_5 = arith.constant 0 : index
    %5 = vector.load %arg5[%c0_4, %c0_5] : memref<1x128xf32, #tpu.memory_space<vmem>>, vector<1x128xf32>
    %6 = vector.broadcast %5 : vector<1x128xf32> to vector<8x128xf32>
    %7 = arith.addf %4, %6 : vector<8x128xf32>
    %c0_6 = arith.constant 0 : index
    %c0_7 = arith.constant 0 : index
    %8 = vector.load %arg6[%c0_6, %c0_7] : memref<8x128xf32, #tpu.memory_space<vmem>>, vector<8x128xf32>
    tpu.vector_store %arg6[%c0_6, %c0_7], %7 {strides = array<i32>} : memref<8x128xf32, #tpu.memory_space<vmem>>, vector<8x128xf32>,
    return
  }
  func.func @transform_0(%arg0: i32, %arg1: i32, %arg2: i32) -> (i32, i32) {
    %c0_i32 = arith.constant 0 : i32
    return %arg0, %arg2 : i32, i32
  }
  func.func @transform_1(%arg0: i32, %arg1: i32, %arg2: i32) -> (i32, i32) {
    %c0_i32 = arith.constant 0 : i32
    return %arg1, %arg2 : i32, i32
  }
  func.func @transform_2(%arg0: i32, %arg1: i32, %arg2: i32) -> (i32, i32) {
    %c0_i32 = arith.constant 0 : i32
    %c0_i32_0 = arith.constant 0 : i32
    return %c0_i32, %arg1 : i32, i32
  }
  func.func @transform_3(%arg0: i32, %arg1: i32, %arg2: i32) -> (i32, i32) {
    %c0_i32 = arith.constant 0 : i32
    return %arg0, %arg1 : i32, i32
  }
}

</mosaic_0001>

<llo_original>
// kernel: tpu_custom_call.1
$region0: #{tpu_custom_call.1}
  #allocation0 [shape = 'u32[]', space=smem, size = 0x4, offset = 0x4, fixed_abs, tag = 'smem constant byte address 0x4 - core index']
  #allocation1 [shape = 'u32[144,128]{1,0:T(1,128)}', space=vmem, size = 0x12000, scoped, tag = 'internal scratch']
  %s0 = inlined_call_operand.hbm [shape: f32[8,128], index: 0, kind: input, shape index: {}]
  %s1 = inlined_call_operand.hbm [shape: f32[128,128], index: 1, kind: input, shape index: {}]
  %s2 = inlined_call_operand.vmem [shape: f32[1,128], index: 2, kind: input, shape index: {}]
  %s3 = inlined_call_operand.hbm [shape: f32[8,128], index: 3, kind: output, shape index: {}]
  %s4 = sld [smem:[#allocation0]]
  $region30: #{tpu_custom_call.1} parent=0
    _
  %s6 = ssub.s32 1, %s4
  %s7 = scalar_select 0, %s6, %s4
  $region1: #{tpu_custom_call.1} parent=0
    #allocation2 [shape = 'u8[4096]{0}', space=vmem, size = 0x1000, scoped, tag = 'input window, operand 0, single buffered']
    #allocation3 [shape = 's32[1]{0}', space=sflag, size = 0x4, scoped, tag = 'scoped memory for tpu_custom_call.1']
    #allocation4 [shape = 's32[1]{0}', space=sflag, size = 0x4, scoped, tag = 'scoped memory for tpu_custom_call.1']
    #allocation5 [shape = 'u8[65536]{0}', space=vmem, size = 0x10000, scoped, tag = 'input window, operand 1, single buffered']
    #allocation6 [shape = 's32[1]{0}', space=sflag, size = 0x4, scoped, tag = 'scoped memory for tpu_custom_call.1']
    #allocation7 [shape = 'u8[4096]{0}', space=vmem, size = 0x1000, scoped, tag = 'output window, operand 0, single buffered']
    %8 = vsyncpa [#allocation3], 0
    %9 = vsyncpa [#allocation6], 0
    %10 = vsyncpa [#allocation4], 0
    // Predicated region
    $region2: #{tpu_custom_call.1} parent=1 // pred_check
      _
    $region3: #{tpu_custom_call.1} parent=1 // pred_check_branch
      %12 = sbr.rel (0) target = $region5
    $region4: #{tpu_custom_call.1} parent=1 // pred_region
      %s14 = ssub.s32 128, 128
      %15 = vsyncadd [#allocation3], %s14
      %s17 = sshll.u32 [#allocation2], 4
      %s18 = int_to_ptr.vmem [resolvable:$true] %s17
      %20 = dma.hbm_to_vmem [thread:$0]  %s0, 128, %s18, [#allocation3]
    $region5: #{tpu_custom_call.1} parent=1 // pred_fallthru
      _
    // Predicated region
    $region6: #{tpu_custom_call.1} parent=1 // pred_check
      _
    $region7: #{tpu_custom_call.1} parent=1 // pred_check_branch
      %22 = sbr.rel (0) target = $region9
    $region8: #{tpu_custom_call.1} parent=1 // pred_region
      %s24 = ssub.s32 2048, 2048
      %25 = vsyncadd [#allocation6], %s24
      %s26 = sshll.u32 [#allocation5], 4
      %s27 = int_to_ptr.vmem [resolvable:$true] %s26
      %32 = dma.hbm_to_vmem [thread:$0]  %s1, 2048, %s27, [#allocation6], 128, 128, 8
    $region9: #{tpu_custom_call.1} parent=1 // pred_fallthru
      _
    // Predicated region
    $region10: #{tpu_custom_call.1} parent=1 // pred_check
      _
    $region11: #{tpu_custom_call.1} parent=1 // pred_check_branch
      %34 = sbr.rel (0) target = $region13
    $region12: #{tpu_custom_call.1} parent=1 // pred_region
      _
    $region13: #{tpu_custom_call.1} parent=1 // pred_fallthru
      _
    // Predicated region
    $region14: #{tpu_custom_call.1} parent=1 // pred_check
      _
    $region15: #{tpu_custom_call.1} parent=1 // pred_check_branch
      %36 = sbr.rel (0) target = $region17
    $region16: #{tpu_custom_call.1} parent=1 // pred_region
      %37 = dma.done [#allocation3], 128
    $region17: #{tpu_custom_call.1} parent=1 // pred_fallthru
      _
    // Predicated region
    $region18: #{tpu_custom_call.1} parent=1 // pred_check
      _
    $region19: #{tpu_custom_call.1} parent=1 // pred_check_branch
      %39 = sbr.rel (0) target = $region21
    $region20: #{tpu_custom_call.1} parent=1 // pred_region
      %40 = dma.done [#allocation6], 2048
    $region21: #{tpu_custom_call.1} parent=1 // pred_fallthru
      _
    %v41 = vld [vmem:[#allocation5] sm:$0xff]
    %v42 = vld [vmem:[#allocation5 + $0x8] sm:$0xff]
    %v43 = vld [vmem:[#allocation5 + $0x10] sm:$0xff]
    %v44 = vld [vmem:[#allocation5 + $0x18] sm:$0xff]
    %v45 = vld [vmem:[#allocation5 + $0x20] sm:$0xff]
    %v46 = vld [vmem:[#allocation5 + $0x28] sm:$0xff]
    %v47 = vld [vmem:[#allocation5 + $0x30] sm:$0xff]
    %v48 = vld [vmem:[#allocation5 + $0x38] sm:$0xff]
    %v49 = vld [vmem:[#allocation5 + $0x40] sm:$0xff]
    %v50 = vld [vmem:[#allocation5 + $0x48] sm:$0xff]
    %v51 = vld [vmem:[#allocation5 + $0x50] sm:$0xff]
    %v52 = vld [vmem:[#allocation5 + $0x58] sm:$0xff]
    %v53 = vld [vmem:[#allocation5 + $0x60] sm:$0xff]
    %v54 = vld [vmem:[#allocation5 + $0x68] sm:$0xff]
    %v55 = vld [vmem:[#allocation5 + $0x70] sm:$0xff]
    %v56 = vld [vmem:[#allocation5 + $0x78] sm:$0xff]
    %v57 = vmax.f32 %v41, 0.0
    %v58 = vmax.f32 %v42, 0.0
    %v59 = vmax.f32 %v43, 0.0
    %v60 = vmax.f32 %v44, 0.0
    %v61 = vmax.f32 %v45, 0.0
    %v62 = vmax.f32 %v46, 0.0
    %v63 = vmax.f32 %v47, 0.0
    %v64 = vmax.f32 %v48, 0.0
    %v65 = vmax.f32 %v49, 0.0
    %v66 = vmax.f32 %v50, 0.0
    %v67 = vmax.f32 %v51, 0.0
    %v68 = vmax.f32 %v52, 0.0
    %v69 = vmax.f32 %v53, 0.0
    %v70 = vmax.f32 %v54, 0.0
    %v71 = vmax.f32 %v55, 0.0
    %v72 = vmax.f32 %v56, 0.0
    %v73 = vld [vmem:[#allocation2] sm:$0xff]
    %v74 = vld [vmem:[%s2] sm:$0x1]
    %v76 = vlaneseq
    %v77 = vshrl.u32 %v76, 7
    %v78 = vsub.s32 0, %v77
    %v79 = vrot.slane %v74, %v78
    %81 = vmatprep.subr.mxu0 0.0
    %82 = vmatpush1.xpose.msra.mxu0 %v72
    %83 = vmatprep.subr.mxu0 0.0
    %84 = vmatpush1.xpose.msra.mxu0 %v71
    %85 = vmatprep.subr.mxu0 0.0
    %86 = vmatpush1.xpose.msra.mxu0 %v70
    %87 = vmatprep.subr.mxu0 0.0
    %88 = vmatpush1.xpose.msra.mxu0 %v69
    %89 = vmatprep.subr.mxu0 0.0
    %90 = vmatpush1.xpose.msra.mxu0 %v68
    %91 = vmatprep.subr.mxu0 0.0
    %92 = vmatpush1.xpose.msra.mxu0 %v67
    %93 = vmatprep.subr.mxu0 0.0
    %94 = vmatpush1.xpose.msra.mxu0 %v66
    %95 = vmatprep.subr.mxu0 0.0
    %96 = vmatpush1.xpose.msra.mxu0 %v65
    %97 = vmatprep.subr.mxu0 0.0
    %98 = vmatpush1.xpose.msra.mxu0 %v64
    %99 = vmatprep.subr.mxu0 0.0
    %100 = vmatpush1.xpose.msra.mxu0 %v63
    %101 = vmatprep.subr.mxu0 0.0
    %102 = vmatpush1.xpose.msra.mxu0 %v62
    %103 = vmatprep.subr.mxu0 0.0
    %104 = vmatpush1.xpose.msra.mxu0 %v61
    %105 = vmatprep.subr.mxu0 0.0
    %106 = vmatpush1.xpose.msra.mxu0 %v60
    %107 = vmatprep.subr.mxu0 0.0
    %108 = vmatpush1.xpose.msra.mxu0 %v59
    %109 = vmatprep.subr.mxu0 0.0
    %110 = vmatpush1.xpose.msra.mxu0 %v58
    %111 = vmatprep.subr.mxu0 0.0
    %112 = vmatpush1.xpose.msra.mxu0 %v57
    %113 = vmatprep.subr.mxu0 0.0
    %114 = vmatpush2.xpose.msra.mxu0 0.0
    %115 = vmatprep.subr.mxu0 0.0
    %116 = vmatpush2.xpose.msra.mxu0 0.0
    %117 = vmatprep.subr.mxu0 0.0
    %118 = vmatpush2.xpose.msra.mxu0 0.0
    %119 = vmatprep.subr.mxu0 0.0
    %120 = vmatpush2.xpose.msra.mxu0 0.0
    %121 = vmatprep.subr.mxu0 0.0
    %122 = vmatpush2.xpose.msra.mxu0 0.0
    %123 = vmatprep.subr.mxu0 0.0
    %124 = vmatpush2.xpose.msra.mxu0 0.0
    %125 = vmatprep.subr.mxu0 0.0
    %126 = vmatpush2.xpose.msra.mxu0 0.0
    %127 = vmatprep.subr.mxu0 0.0
    %128 = vmatpush2.xpose.msra.mxu0 0.0
    %129 = vmatprep.subr.mxu0 0.0
    %130 = vmatpush2.xpose.msra.mxu0 0.0
    %131 = vmatprep.subr.mxu0 0.0
    %132 = vmatpush2.xpose.msra.mxu0 0.0
    %133 = vmatprep.subr.mxu0 0.0
    %134 = vmatpush2.xpose.msra.mxu0 0.0
    %135 = vmatprep.subr.mxu0 0.0
    %136 = vmatpush2.xpose.msra.mxu0 0.0
    %137 = vmatprep.subr.mxu0 0.0
    %138 = vmatpush2.xpose.msra.mxu0 0.0
    %139 = vmatprep.subr.mxu0 0.0
    %140 = vmatpush2.xpose.msra.mxu0 0.0
    %141 = vmatprep.subr.mxu0 0.0
    %142 = vmatpush2.xpose.msra.mxu0 0.0
    %143 = vmatprep.subr.mxu0 0.0
    %144 = vmatpush2.xpose.msra.mxu0 0.0
    %145 = vmatprep.mubr.f32.mxu0 0.0
    %146 = vmatmul.mubr.f32.gmra.mxu0 %v73
    %v147 = vpop.f32.mrf.mxu0
    %v148 = vadd.f32 %v79, %v147
    %v149 = vpop.f32.mrf.mxu0
    %150 = vdwg.mxu0
    %151 = vst [vmem:[#allocation7] sm:$0xff] %v148
    // Predicated region
    $region22: #{tpu_custom_call.1} parent=1 // pred_check
      _
    $region23: #{tpu_custom_call.1} parent=1 // pred_check_branch
      %153 = sbr.rel (0) target = $region25
    $region24: #{tpu_custom_call.1} parent=1 // pred_region
      %s155 = ssub.s32 128, 128
      %156 = vsyncadd [#allocation4], %s155
      %s158 = sshll.u32 [#allocation7], 4
      %s159 = int_to_ptr.vmem [resolvable:$true] %s158
      %161 = dma.vmem_to_hbm [thread:$0]  %s159, 128, %s3, [#allocation4]
    $region25: #{tpu_custom_call.1} parent=1 // pred_fallthru
      _
    // Predicated region
    $region26: #{tpu_custom_call.1} parent=1 // pred_check
      _
    $region27: #{tpu_custom_call.1} parent=1 // pred_check_branch
      %163 = sbr.rel (0) target = $region29
    $region28: #{tpu_custom_call.1} parent=1 // pred_region
      %164 = dma.done [#allocation4], 128
    $region29: #{tpu_custom_call.1} parent=1 // pred_fallthru
      _
    %165 = vsyncpa [#allocation3], 1
    %166 = vsyncpa [#allocation6], 1
    %167 = vsyncpa [#allocation4], 1

</llo_original>
